<compile_context>
chip_gen: v5e
topology: v5e:2x2
jax: 0.10.0
libtpu: 0.0.40
codegen_flags: <defaults>
</compile_context>

<pallas_src>
import functools
from itertools import combinations

import numpy as np
import jax
import jax.numpy as jnp
from jax.experimental import pallas as pl
from jax.experimental.pallas import tpu as pltpu

LANE = 128
SUBLANE = 8


def _round_up(x, m):
    return ((x + m - 1) // m) * m


def _npair_partial_kernel(emb_a_ref, emb_all_ref, sq_a_ref, sq_all_ref,
                          lab_a_ref, lab_all_ref, partial_ref,
                          *, n_valid, tile_a):
    """One anchor-row tile: fused distances + masked logsumexp + pair reduction."""
    ea = emb_a_ref[...]                                   # (TA, D)  f32 anchor rows
    e = emb_all_ref[...]                                  # (Np, D)  f32 all rows (zero padded)

    # Squared-Euclidean distances via MXU: d[a, n] = ||a||^2 + ||n||^2 - 2 <a, n>.
    gram = jax.lax.dot_general(ea, e, (((1,), (1,)), ((), ())),
                               preferred_element_type=jnp.float32)        # (TA, Np)
    dmat = -2.0 * gram + sq_a_ref[...] + sq_all_ref[...]                  # (TA, Np)

    lab_a = lab_a_ref[...]                                # (TA, 1)  int32
    lab_n = lab_all_ref[...]                              # (1, Np)  int32
    col = jax.lax.broadcasted_iota(jnp.int32, dmat.shape, 1)
    row0 = pl.program_id(0) * tile_a
    row = jax.lax.broadcasted_iota(jnp.int32, dmat.shape, 0) + row0

    col_valid = col < n_valid
    same = lab_a == lab_n                                                 # (TA, Np)
    negb = jnp.logical_and(jnp.logical_not(same), col_valid)

    # Numerically stable per-anchor logsumexp over negatives.
    neg_big = jnp.float32(-1e30)
    m = jnp.max(jnp.where(negb, dmat, neg_big), axis=1, keepdims=True)    # (TA, 1)
    dm = jnp.minimum(dmat - m, 0.0)
    s = jnp.sum(jnp.where(negb, jnp.exp(dm), 0.0), axis=1, keepdims=True)  # (TA, 1)

    # L[a, p] = log(1 + sum_n exp(d[a,n] - d[a,p])) = log1p(exp(m - d[a,p]) * S).
    pair_loss = jnp.log1p(jnp.exp(m - dmat) * s)                          # (TA, Np)

    # (anchor, positive) pairs: same label, a < p, p a real sample.
    posb = jnp.logical_and(jnp.logical_and(same, col > row), col_valid)
    pos_sum = jnp.sum(jnp.where(posb, pair_loss, 0.0), axis=1, keepdims=True)  # (TA, 1)

    # Per-anchor weight 1 / C(group_size, 2); zero for padded anchors or
    # groups with fewer than two members.
    cnt = jnp.sum(jnp.where(jnp.logical_and(same, col_valid), 1.0, 0.0),
                  axis=1, keepdims=True)                                  # (TA, 1) incl. self
    row_idx = jax.lax.broadcasted_iota(jnp.int32, (ea.shape[0], 1), 0) + row0
    n_pairs = jnp.maximum(cnt * (cnt - 1.0) * 0.5, 1.0)
    w = jnp.where(jnp.logical_and(row_idx < n_valid, cnt >= 2.0),
                  1.0 / n_pairs, 0.0)

    partial_ref[...] = w * pos_sum                                        # (TA, 1)


def npair_partial_sums(embeddings, labels):
    """Returns per-anchor partials; their sum over anchors is sum of group-mean losses."""
    embeddings = embeddings.astype(jnp.float32)
    labels = labels.astype(jnp.int32)
    N, D = embeddings.shape

    n_cols = _round_up(N, LANE)                     # lane-dense distance columns
    tile_a = min(LANE, _round_up(N, SUBLANE))       # anchor-row tile (multiple of 8)
    n_rows = _round_up(N, tile_a)
    grid = (n_rows // tile_a,)

    emb_rows = jnp.pad(embeddings, ((0, n_rows - N), (0, 0)))
    emb_cols = jnp.pad(embeddings, ((0, n_cols - N), (0, 0)))
    sq = jnp.sum(embeddings * embeddings, axis=1)
    sq_rows = jnp.pad(sq, (0, n_rows - N))[:, None]          # (n_rows, 1)
    sq_cols = jnp.pad(sq, (0, n_cols - N))[None, :]          # (1, n_cols)
    lab_rows = jnp.pad(labels, (0, n_rows - N))[:, None]     # (n_rows, 1)  (pad masked in-kernel)
    lab_cols = jnp.pad(labels, (0, n_cols - N))[None, :]     # (1, n_cols)  (pad masked in-kernel)

    # VMEM budget derived from the tiles (double-buffered inputs + elementwise
    # temps), kept well under the v7x 64 MiB physical ceiling.
    vmem_est = 4 * (2 * tile_a * D + 2 * n_cols * D + 6 * tile_a * n_cols
                    + 8 * tile_a + 4 * n_cols)
    vmem_limit = int(min(48 * 2**20, max(16 * 2**20, 2 * vmem_est)))

    cost = pl.CostEstimate(
        flops=2 * n_rows * n_cols * D + 12 * n_rows * n_cols,
        transcendentals=2 * n_rows * n_cols,
        bytes_accessed=4 * (n_rows * D + n_cols * D + 2 * n_rows + 2 * n_cols + n_rows),
    )

    # TODO(synk): for large production N/D, cast the MXU operands to bf16 (keep
    # preferred_element_type=f32) and use 256-multiple tiles on v6e/v7x.
    kernel = functools.partial(_npair_partial_kernel, n_valid=N, tile_a=tile_a)
    partial = pl.pallas_call(
        kernel,
        out_shape=jax.ShapeDtypeStruct((n_rows, 1), jnp.float32),
        grid=grid,
        in_specs=[
            pl.BlockSpec((tile_a, D), lambda i: (i, 0)),      # anchor embedding rows
            pl.BlockSpec((n_cols, D), lambda i: (0, 0)),      # all embeddings (padded, resident)
            pl.BlockSpec((tile_a, 1), lambda i: (i, 0)),      # anchor ||e||^2
            pl.BlockSpec((1, n_cols), lambda i: (0, 0)),      # all ||e||^2 (row)
            pl.BlockSpec((tile_a, 1), lambda i: (i, 0)),      # anchor labels (column)
            pl.BlockSpec((1, n_cols), lambda i: (0, 0)),      # all labels (row)
        ],
        out_specs=pl.BlockSpec((tile_a, 1), lambda i: (i, 0)),
        compiler_params=pltpu.CompilerParams(
            dimension_semantics=("parallel",),
            vmem_limit_bytes=vmem_limit,
        ),
        cost_estimate=cost,
    )(emb_rows, emb_cols, sq_rows, sq_cols, lab_rows, lab_cols)
    return partial[:N, 0]


def _npair_reduce(partials, labels):
    """Tiny label-only epilogue: count labels with >=2 members and average."""
    n = labels.shape[0]
    labels = labels.astype(jnp.int32)
    same = labels[:, None] == labels[None, :]                 # (N, N)
    cnt = jnp.sum(same.astype(jnp.int32), axis=1)
    col = jnp.arange(n)[None, :]
    row = jnp.arange(n)[:, None]
    is_first = jnp.sum(jnp.logical_and(same, col < row).astype(jnp.int32), axis=1) == 0
    num_groups = jnp.sum(jnp.logical_and(is_first, cnt >= 2).astype(jnp.int32))
    loss = jnp.sum(partials) / jnp.maximum(num_groups, 1).astype(jnp.float32)
    return loss, num_groups


@jax.jit
def _npair_loss_fn(embeddings, labels):
    partials = npair_partial_sums(embeddings, labels)         # Pallas kernel (hot path)
    return _npair_reduce(partials, labels)                    # tiny on-device epilogue


class FunctionNPairLossPallas:
    """Mirrors FunctionNPairLoss.forward (margin stored but unused, as in the reference)."""

    def __init__(self, margin):
        self.margin = margin  # not used in forward, kept for parity with the PyTorch module

    def __call__(self, embeddings, labels):
        loss, num_groups = _npair_loss_fn(embeddings, labels)
        loss, num_groups = jax.block_until_ready((loss, num_groups))
        return np.float32(loss), int(num_groups)


def _reference_numpy(embeddings, labels):
    """Pure NumPy transcription of the PyTorch forward, for a correctness check."""
    emb = np.asarray(embeddings, dtype=np.float32)
    labels_np = np.asarray(labels)
    d = (-2.0 * emb @ emb.T
         + (emb ** 2).sum(1)[None, :]
         + (emb ** 2).sum(1)[:, None]).astype(np.float32)
    n_pair_loss_list = []
    for label in set(labels_np.tolist()):
        label_mask = labels_np == label
        label_indices = np.where(label_mask)[0]
        if len(label_indices) < 2:
            continue
        negative_indices = np.where(np.logical_not(label_mask))[0]
        loss_list = []
        for a, p in combinations(label_indices, 2):
            loss_values = d[a, negative_indices] - d[a, p]
            loss_list.append(np.float32(np.log(np.exp(loss_values).sum() + 1.0)))
        n_pair_loss_list.append(np.float32(np.mean(np.asarray(loss_list, dtype=np.float32))))
    return (np.float32(np.mean(np.asarray(n_pair_loss_list, dtype=np.float32))),
            len(n_pair_loss_list))


if __name__ == "__main__":
    key = jax.random.PRNGKey(0)
    N, D = 16, 32                          # 16 samples, 32-dim embeddings
    embeddings = 0.3 * jax.random.normal(key, (N, D), dtype=jnp.float32)
    labels = jnp.array([0, 0, 0, 0, 1, 1, 1, 1, 2, 2, 2, 2, 3, 3, 3, 3], dtype=jnp.int32)

    module = FunctionNPairLossPallas(margin=1.0)
    loss_value, num_labels = module(embeddings, labels)

    ref_value, ref_num = _reference_numpy(embeddings, labels)
    assert num_labels == ref_num, (num_labels, ref_num)
    assert np.allclose(loss_value, ref_value, rtol=2e-3, atol=2e-3), (loss_value, ref_value)

    print("KERNEL_OK")
</pallas_src>

<mosaic_0001>
module attributes {stable_mosaic.version = 11 : i64} {
  func.func @_npair_partial_kernel(%arg0: i32, %arg1: memref<16x32xf32, #tpu.memory_space<vmem>>, %arg2: memref<128x32xf32, #tpu.memory_space<vmem>>, %arg3: memref<16x1xf32, #tpu.memory_space<vmem>>, %arg4: memref<1x128xf32, #tpu.memory_space<vmem>>, %arg5: memref<16x1xi32, #tpu.memory_space<vmem>>, %arg6: memref<1x128xi32, #tpu.memory_space<vmem>>, %arg7: memref<16x1xf32, #tpu.memory_space<vmem>>) attributes {dimension_semantics = [#tpu.dimension_semantics<parallel>], iteration_bounds = array<i64: 1>, scalar_prefetch = 0 : i64, scratch_operands = 0 : i64, tpu.core_type = #tpu.core_type<tc>, window_params = [{transform_indices = @transform_0, window_bounds = array<i64: 16, 32>}, {pipeline_mode = #tpu.pipeline_mode<synchronous>, transform_indices = @transform_1, window_bounds = array<i64: 128, 32>}, {transform_indices = @transform_2, window_bounds = array<i64: 16, 1>}, {pipeline_mode = #tpu.pipeline_mode<synchronous>, transform_indices = @transform_3, window_bounds = array<i64: 1, 128>}, {transform_indices = @transform_4, window_bounds = array<i64: 16, 1>}, {pipeline_mode = #tpu.pipeline_mode<synchronous>, transform_indices = @transform_5, window_bounds = array<i64: 1, 128>}, {transform_indices = @transform_6, window_bounds = array<i64: 16, 1>}]} {
    %c0 = arith.constant 0 : index
    %c0_0 = arith.constant 0 : index
    %0 = vector.load %arg1[%c0, %c0_0] : memref<16x32xf32, #tpu.memory_space<vmem>>, vector<16x32xf32>
    %c0_1 = arith.constant 0 : index
    %c0_2 = arith.constant 0 : index
    %1 = vector.load %arg2[%c0_1, %c0_2] : memref<128x32xf32, #tpu.memory_space<vmem>>, vector<128x32xf32>
    %cst = arith.constant dense<0.000000e+00> : vector<16x128xf32>
    %2 = tpu.matmul %0, %1, %cst {dimension_numbers = #tpu.dot_dimension_numbers<[1], [1], [0], [0], [0, 0, 1, 0], [], []>} : vector<16x32xf32>, vector<128x32xf32>, vector<16x128xf32> -> vector<16x128xf32>
    %cst_3 = arith.constant -2.000000e+00 : f32
    %3 = vector.broadcast %cst_3 : f32 to vector<16x128xf32>
    %4 = arith.mulf %3, %2 : vector<16x128xf32>
    %c0_4 = arith.constant 0 : index
    %c0_5 = arith.constant 0 : index
    %5 = vector.load %arg3[%c0_4, %c0_5] : memref<16x1xf32, #tpu.memory_space<vmem>>, vector<16x1xf32>
    %6 = vector.broadcast %5 : vector<16x1xf32> to vector<16x128xf32>
    %7 = arith.addf %4, %6 : vector<16x128xf32>
    %c0_6 = arith.constant 0 : index
    %c0_7 = arith.constant 0 : index
    %8 = vector.load %arg4[%c0_6, %c0_7] : memref<1x128xf32, #tpu.memory_space<vmem>>, vector<1x128xf32>
    %9 = vector.broadcast %8 : vector<1x128xf32> to vector<16x128xf32>
    %10 = arith.addf %7, %9 : vector<16x128xf32>
    %c0_8 = arith.constant 0 : index
    %c0_9 = arith.constant 0 : index
    %11 = vector.load %arg5[%c0_8, %c0_9] : memref<16x1xi32, #tpu.memory_space<vmem>>, vector<16x1xi32>
    %c0_10 = arith.constant 0 : index
    %c0_11 = arith.constant 0 : index
    %12 = vector.load %arg6[%c0_10, %c0_11] : memref<1x128xi32, #tpu.memory_space<vmem>>, vector<1x128xi32>
    %13 = tpu.iota {dimensions = array<i32: 1>} : vector<16x128xi32>
    %c16_i32 = arith.constant 16 : i32
    %14 = arith.muli %arg0, %c16_i32 : i32
    %15 = tpu.iota {dimensions = array<i32: 0>} : vector<16x128xi32>
    %16 = vector.broadcast %14 : i32 to vector<16x128xi32>
    %17 = arith.addi %15, %16 : vector<16x128xi32>
    %c16_i32_12 = arith.constant 16 : i32
    %18 = vector.broadcast %c16_i32_12 : i32 to vector<16x128xi32>
    %19 = arith.cmpi slt, %13, %18 : vector<16x128xi32>
    %20 = vector.broadcast %11 : vector<16x1xi32> to vector<16x128xi32>
    %21 = vector.broadcast %12 : vector<1x128xi32> to vector<16x128xi32>
    %22 = arith.cmpi eq, %20, %21 : vector<16x128xi32>
    %cst_13 = arith.constant dense<true> : vector<16x128xi1>
    %23 = arith.xori %22, %cst_13 : vector<16x128xi1>
    %24 = arith.andi %23, %19 : vector<16x128xi1>
    %cst_14 = arith.constant -1.000000e+30 : f32
    %25 = vector.broadcast %cst_14 : f32 to vector<16x128xf32>
    %26 = arith.select %24, %10, %25 : vector<16x128xi1>, vector<16x128xf32>
    %cst_15 = arith.constant dense<0xFF800000> : vector<16xf32>
    %27 = vector.multi_reduction <maximumf>, %26, %cst_15 [1] : vector<16x128xf32> to vector<16xf32>
    %28 = vector.shape_cast %27 : vector<16xf32> to vector<16x1xf32>
    %29 = vector.broadcast %28 : vector<16x1xf32> to vector<16x128xf32>
    %30 = arith.subf %10, %29 : vector<16x128xf32>
    %cst_16 = arith.constant 0.000000e+00 : f32
    %31 = vector.broadcast %cst_16 : f32 to vector<16x128xf32>
    %32 = arith.minimumf %30, %31 : vector<16x128xf32>
    %33 = math.exp %32 : vector<16x128xf32>
    %cst_17 = arith.constant 0.000000e+00 : f32
    %34 = vector.broadcast %cst_17 : f32 to vector<16x128xf32>
    %35 = arith.select %24, %33, %34 : vector<16x128xi1>, vector<16x128xf32>
    %cst_18 = arith.constant dense<0.000000e+00> : vector<16xf32>
    %36 = vector.multi_reduction <add>, %35, %cst_18 [1] : vector<16x128xf32> to vector<16xf32>
    %37 = vector.shape_cast %36 : vector<16xf32> to vector<16x1xf32>
    %38 = vector.broadcast %28 : vector<16x1xf32> to vector<16x128xf32>
    %39 = arith.subf %38, %10 : vector<16x128xf32>
    %40 = math.exp %39 : vector<16x128xf32>
    %41 = vector.broadcast %37 : vector<16x1xf32> to vector<16x128xf32>
    %42 = arith.mulf %40, %41 : vector<16x128xf32>
    %43 = math.log1p %42 : vector<16x128xf32>
    %44 = arith.cmpi sgt, %13, %17 : vector<16x128xi32>
    %45 = arith.andi %22, %44 : vector<16x128xi1>
    %46 = arith.andi %45, %19 : vector<16x128xi1>
    %cst_19 = arith.constant 0.000000e+00 : f32
    %47 = vector.broadcast %cst_19 : f32 to vector<16x128xf32>
    %48 = arith.select %46, %43, %47 : vector<16x128xi1>, vector<16x128xf32>
    %cst_20 = arith.constant dense<0.000000e+00> : vector<16xf32>
    %49 = vector.multi_reduction <add>, %48, %cst_20 [1] : vector<16x128xf32> to vector<16xf32>
    %50 = vector.shape_cast %49 : vector<16xf32> to vector<16x1xf32>
    %51 = arith.andi %22, %19 : vector<16x128xi1>
    %cst_21 = arith.constant 1.000000e+00 : f32
    %cst_22 = arith.constant 0.000000e+00 : f32
    %52 = vector.broadcast %cst_21 : f32 to vector<16x128xf32>
    %53 = vector.broadcast %cst_22 : f32 to vector<16x128xf32>
    %54 = arith.select %51, %52, %53 : vector<16x128xi1>, vector<16x128xf32>
    %cst_23 = arith.constant dense<0.000000e+00> : vector<16xf32>
    %55 = vector.multi_reduction <add>, %54, %cst_23 [1] : vector<16x128xf32> to vector<16xf32>
    %56 = vector.shape_cast %55 : vector<16xf32> to vector<16x1xf32>
    %57 = tpu.iota {dimensions = array<i32: 0>} : vector<16x1xi32>
    %58 = vector.broadcast %14 : i32 to vector<16x1xi32>
    %59 = arith.addi %57, %58 : vector<16x1xi32>
    %cst_24 = arith.constant 1.000000e+00 : f32
    %60 = vector.broadcast %cst_24 : f32 to vector<16x1xf32>
    %61 = arith.subf %56, %60 : vector<16x1xf32>
    %62 = arith.mulf %56, %61 : vector<16x1xf32>
    %cst_25 = arith.constant 5.000000e-01 : f32
    %63 = vector.broadcast %cst_25 : f32 to vector<16x1xf32>
    %64 = arith.mulf %62, %63 : vector<16x1xf32>
    %cst_26 = arith.constant 1.000000e+00 : f32
    %65 = vector.broadcast %cst_26 : f32 to vector<16x1xf32>
    %66 = arith.maximumf %64, %65 : vector<16x1xf32>
    %c16_i32_27 = arith.constant 16 : i32
    %67 = vector.broadcast %c16_i32_27 : i32 to vector<16x1xi32>
    %68 = arith.cmpi slt, %59, %67 : vector<16x1xi32>
    %cst_28 = arith.constant 2.000000e+00 : f32
    %69 = vector.broadcast %cst_28 : f32 to vector<16x1xf32>
    %70 = arith.cmpf oge, %56, %69 : vector<16x1xf32>
    %71 = arith.andi %68, %70 : vector<16x1xi1>
    %cst_29 = arith.constant 1.000000e+00 : f32
    %72 = vector.broadcast %cst_29 : f32 to vector<16x1xf32>
    %73 = arith.divf %72, %66 : vector<16x1xf32>
    %cst_30 = arith.constant 0.000000e+00 : f32
    %74 = vector.broadcast %cst_30 : f32 to vector<16x1xf32>
    %75 = arith.select %71, %73, %74 : vector<16x1xi1>, vector<16x1xf32>
    %76 = arith.mulf %75, %50 : vector<16x1xf32>
    %c0_31 = arith.constant 0 : index
    %c0_32 = arith.constant 0 : index
    %77 = vector.load %arg7[%c0_31, %c0_32] : memref<16x1xf32, #tpu.memory_space<vmem>>, vector<16x1xf32>
    tpu.vector_store %arg7[%c0_31, %c0_32], %76 {strides = array<i32>} : memref<16x1xf32, #tpu.memory_space<vmem>>, vector<16x1xf32>,
    return
  }
  func.func @transform_0(%arg0: i32) -> (i32, i32) {
    %c0_i32 = arith.constant 0 : i32
    %c0_i32_0 = arith.constant 0 : i32
    return %arg0, %c0_i32 : i32, i32
  }
  func.func @transform_1(%arg0: i32) -> (i32, i32) {
    %c0_i32 = arith.constant 0 : i32
    %c0_i32_0 = arith.constant 0 : i32
    %c0_i32_1 = arith.constant 0 : i32
    return %c0_i32, %c0_i32_0 : i32, i32
  }
  func.func @transform_2(%arg0: i32) -> (i32, i32) {
    %c0_i32 = arith.constant 0 : i32
    %c0_i32_0 = arith.constant 0 : i32
    return %arg0, %c0_i32 : i32, i32
  }
  func.func @transform_3(%arg0: i32) -> (i32, i32) {
    %c0_i32 = arith.constant 0 : i32
    %c0_i32_0 = arith.constant 0 : i32
    %c0_i32_1 = arith.constant 0 : i32
    return %c0_i32, %c0_i32_0 : i32, i32
  }
  func.func @transform_4(%arg0: i32) -> (i32, i32) {
    %c0_i32 = arith.constant 0 : i32
    %c0_i32_0 = arith.constant 0 : i32
    return %arg0, %c0_i32 : i32, i32
  }
  func.func @transform_5(%arg0: i32) -> (i32, i32) {
    %c0_i32 = arith.constant 0 : i32
    %c0_i32_0 = arith.constant 0 : i32
    %c0_i32_1 = arith.constant 0 : i32
    return %c0_i32, %c0_i32_0 : i32, i32
  }
  func.func @transform_6(%arg0: i32) -> (i32, i32) {
    %c0_i32 = arith.constant 0 : i32
    %c0_i32_0 = arith.constant 0 : i32
    return %arg0, %c0_i32 : i32, i32
  }
}

</mosaic_0001>

<llo_original>
// kernel: _npair_loss_fn.1
$region0: #{_npair_loss_fn.1}
  #allocation0 [shape = 'u32[]', space=smem, size = 0x4, offset = 0x4, fixed_abs, tag = 'smem constant byte address 0x4 - core index']
  #allocation1 [shape = 'u32[72,128]{1,0:T(1,128)}', space=vmem, size = 0x9000, scoped, tag = 'internal scratch']
  %s0 = inlined_call_operand.vmem [shape: f32[16,32], index: 0, kind: input, shape index: {}]
  %s1 = inlined_call_operand.vmem [shape: f32[128,32], index: 1, kind: input, shape index: {}]
  %s2 = inlined_call_operand.vmem [shape: f32[16,1], index: 2, kind: input, shape index: {}]
  %s3 = inlined_call_operand.vmem [shape: f32[1,128], index: 3, kind: input, shape index: {}]
  %s4 = inlined_call_operand.vmem [shape: s32[16,1], index: 4, kind: input, shape index: {}]
  %s5 = inlined_call_operand.vmem [shape: s32[1,128], index: 5, kind: input, shape index: {}]
  %s6 = inlined_call_operand.vmem [shape: f32[16,1], index: 6, kind: output, shape index: {}]
  %s7 = sld [smem:[#allocation0]]
  $region34: #{_npair_loss_fn.1} parent=0
    _
  %s9 = ssub.s32 1, %s7
  %s10 = scalar_select 0, %s9, %s7
  // Predicated region
  $region2: #{_npair_loss_fn.1} parent=0 // pred_check
    _
  $region3: #{_npair_loss_fn.1} parent=0 // pred_check_branch
    %12 = sbr.rel (0) target = $region5
  $region4: #{_npair_loss_fn.1} parent=0 // pred_region
    _
  $region5: #{_npair_loss_fn.1} parent=0 // pred_fallthru
    _
  // Predicated region
  $region6: #{_npair_loss_fn.1} parent=0 // pred_check
    _
  $region7: #{_npair_loss_fn.1} parent=0 // pred_check_branch
    %14 = sbr.rel (0) target = $region9
  $region8: #{_npair_loss_fn.1} parent=0 // pred_region
    _
  $region9: #{_npair_loss_fn.1} parent=0 // pred_fallthru
    _
  // Predicated region
  $region10: #{_npair_loss_fn.1} parent=0 // pred_check
    _
  $region11: #{_npair_loss_fn.1} parent=0 // pred_check_branch
    %16 = sbr.rel (0) target = $region13
  $region12: #{_npair_loss_fn.1} parent=0 // pred_region
    _
  $region13: #{_npair_loss_fn.1} parent=0 // pred_fallthru
    _
  // Predicated region
  $region14: #{_npair_loss_fn.1} parent=0 // pred_check
    _
  $region15: #{_npair_loss_fn.1} parent=0 // pred_check_branch
    %18 = sbr.rel (0) target = $region17
  $region16: #{_npair_loss_fn.1} parent=0 // pred_region
    _
  $region17: #{_npair_loss_fn.1} parent=0 // pred_fallthru
    _
  // Predicated region
  $region18: #{_npair_loss_fn.1} parent=0 // pred_check
    _
  $region19: #{_npair_loss_fn.1} parent=0 // pred_check_branch
    %20 = sbr.rel (0) target = $region21
  $region20: #{_npair_loss_fn.1} parent=0 // pred_region
    _
  $region21: #{_npair_loss_fn.1} parent=0 // pred_fallthru
    _
  // Predicated region
  $region22: #{_npair_loss_fn.1} parent=0 // pred_check
    _
  $region23: #{_npair_loss_fn.1} parent=0 // pred_check_branch
    %22 = sbr.rel (0) target = $region25
  $region24: #{_npair_loss_fn.1} parent=0 // pred_region
    _
  $region25: #{_npair_loss_fn.1} parent=0 // pred_fallthru
    _
  %v23 = vld [vmem:[%s0] sm:$0xff]
  %v24 = vld [vmem:[%s0 + $0x8] sm:$0xff]
  %v25 = vld [vmem:[%s1] sm:$0xff]
  %v26 = vld [vmem:[%s1 + $0x8] sm:$0xff]
  %v27 = vld [vmem:[%s1 + $0x10] sm:$0xff]
  %v28 = vld [vmem:[%s1 + $0x18] sm:$0xff]
  %v29 = vld [vmem:[%s1 + $0x20] sm:$0xff]
  %v30 = vld [vmem:[%s1 + $0x28] sm:$0xff]
  %v31 = vld [vmem:[%s1 + $0x30] sm:$0xff]
  %v32 = vld [vmem:[%s1 + $0x38] sm:$0xff]
  %v33 = vld [vmem:[%s1 + $0x40] sm:$0xff]
  %v34 = vld [vmem:[%s1 + $0x48] sm:$0xff]
  %v35 = vld [vmem:[%s1 + $0x50] sm:$0xff]
  %v36 = vld [vmem:[%s1 + $0x58] sm:$0xff]
  %v37 = vld [vmem:[%s1 + $0x60] sm:$0xff]
  %v38 = vld [vmem:[%s1 + $0x68] sm:$0xff]
  %v39 = vld [vmem:[%s1 + $0x70] sm:$0xff]
  %v40 = vld [vmem:[%s1 + $0x78] sm:$0xff]
  %vm41 = vcmask 261120
  %v43 = vsel %vm41, %v23, 0
  %v46 = vsel %vm41, %v24, 0
  %v49 = vsel %vm41, %v25, 0
  %v52 = vsel %vm41, %v26, 0
  %v55 = vsel %vm41, %v27, 0
  %v58 = vsel %vm41, %v28, 0
  %v61 = vsel %vm41, %v29, 0
  %v64 = vsel %vm41, %v30, 0
  %v67 = vsel %vm41, %v31, 0
  %v70 = vsel %vm41, %v32, 0
  %v73 = vsel %vm41, %v33, 0
  %v76 = vsel %vm41, %v34, 0
  %v79 = vsel %vm41, %v35, 0
  %v82 = vsel %vm41, %v36, 0
  %v85 = vsel %vm41, %v37, 0
  %v88 = vsel %vm41, %v38, 0
  %v91 = vsel %vm41, %v39, 0
  %v94 = vsel %vm41, %v40, 0
  %96 = vmatpush.xpose.msra.mxu0 %v94
  %97 = vmatpush.xpose.msra.mxu0 %v91
  %98 = vmatpush.xpose.msra.mxu0 %v88
  %99 = vmatpush.xpose.msra.mxu0 %v85
  %100 = vmatpush.xpose.msra.mxu0 %v82
  %101 = vmatpush.xpose.msra.mxu0 %v79
  %102 = vmatpush.xpose.msra.mxu0 %v76
  %103 = vmatpush.xpose.msra.mxu0 %v73
  %104 = vmatpush.xpose.msra.mxu0 %v70
  %105 = vmatpush.xpose.msra.mxu0 %v67
  %106 = vmatpush.xpose.msra.mxu0 %v64
  %107 = vmatpush.xpose.msra.mxu0 %v61
  %108 = vmatpush.xpose.msra.mxu0 %v58
  %109 = vmatpush.xpose.msra.mxu0 %v55
  %110 = vmatpush.xpose.msra.mxu0 %v52
  %111 = vmatpush.xpose.msra.mxu0 %v49
  %112 = vmatmul.f32.gmra.mxu0 %v43
  %v113 = vpop.f32.mrf.mxu0
  %v114 = vadd.f32 0.0, %v113
  %115 = vmatmul.f32.gmra.mxu0 %v46
  %v116 = vpop.f32.mrf.mxu0
  %v117 = vadd.f32 0.0, %v116
  %118 = vdwg.mxu0
  %v119 = vmul.f32 %v114, -2.0
  %v120 = vmul.f32 %v117, -2.0
  %v121 = vld [vmem:[%s2] sm:$0xff]
  %v122 = vld [vmem:[%s2 + $0x8] sm:$0xff]
  %124 = vset.pattern.permute.xlu0 0
  %125 = vperm.xlu0 %124, %v121
  %v126 = vpop.permute.xlu0 %125
  %129 = vset.pattern.permute.xlu0 0
  %130 = vperm.xlu0 %129, %v122
  %v131 = vpop.permute.xlu0 %130
  %v133 = vadd.f32 %v119, %v126
  %v134 = vadd.f32 %v120, %v131
  %v135 = vld [vmem:[%s3] sm:$0x1]
  %v137 = vperm.slane %v135, 0
  %v139 = vadd.f32 %v133, %v137
  %v140 = vadd.f32 %v134, %v137
  %v141 = vld [vmem:[%s4] sm:$0xff]
  %v142 = vld [vmem:[%s4 + $0x8] sm:$0xff]
  %v143 = vld [vmem:[%s5] sm:$0x1]
  %v144 = vlaneseq
  %v145 = vand.u32 %v144, 127
  %s146 = smul.u32 0, 16
  %v147 = vlaneseq
  %v148 = vshrl.u32 %v147, 7
  %v149 = vadd.s32 %v148, 8
  %v150 = vstv %s146
  %v151 = vadd.s32 %v148, %v150
  %v152 = vadd.s32 %v149, %v150
  %vm153 = vcmp.lt.s32.totalorder %v145, 16
  %154 = vset.pattern.permute.xlu0 0
  %155 = vperm.xlu0 %154, %v141
  %v156 = vpop.permute.xlu0 %155
  %157 = vset.pattern.permute.xlu0 0
  %158 = vperm.xlu0 %157, %v142
  %v159 = vpop.permute.xlu0 %158
  %v160 = vperm.slane %v143, 0
  %vm161 = vcmp.eq.s32.totalorder %v156, %v160
  %vm162 = vcmp.eq.s32.totalorder %v159, %v160
  %vm163 = vmxor %vm161, 1
  %vm164 = vmxor %vm162, 1
  %vm165 = vmand %vm163, %vm153
  %vm166 = vmand %vm164, %vm153
  %v167 = vsel %vm165, %v139, -1e+30
  %v168 = vsel %vm166, %v140, -1e+30
  %169 = vmax.xlane.f32.xlu0 %v167
  %v170 = vpop.xlane.xlu0 %169
  %171 = vmax.xlane.f32.xlu0 %v168
  %v172 = vpop.xlane.xlu0 %171
  %v173 = vsub.f32 %v139, %v170
  %v174 = vsub.f32 %v140, %v172
  %v175 = vmin.f32 %v173, 0.0
  %v176 = vmin.f32 %v174, 0.0
  %v177 = vmul.f32 %v175, 1.442695
  %v178 = vpow.pop %v177
  %v179 = vmul.f32 %v176, 1.442695
  %v180 = vpow.pop %v179
  %v181 = vsel %vm165, %v178, 0.0
  %v182 = vsel %vm166, %v180, 0.0
  %183 = vadd.xlane.f32.xlu0 %v181
  %v184 = vpop.xlane.xlu0 %183
  %185 = vadd.xlane.f32.xlu0 %v182
  %v186 = vpop.xlane.xlu0 %185
  %v187 = vsub.f32 %v170, %v139
  %v188 = vsub.f32 %v172, %v140
  %v189 = vmul.f32 %v187, 1.442695
  %v190 = vpow.pop %v189
  %v191 = vmul.f32 %v188, 1.442695
  %v192 = vpow.pop %v191
  %v193 = vmul.f32 %v190, %v184
  %v194 = vmul.f32 %v192, %v186
  %v195 = vadd.f32 %v193, 1.0
  %v196 = vlog2.pop %v195
  %v197 = vmul.f32 %v196, 0.6931472
  %v198 = vmul.f32 -0.5, %v193
  %v199 = vadd.f32 %v198, 1.0
  %v200 = vmul.f32 %v199, %v193
  %v201 = vand.u32 2147483647, %v193
  %vm202 = vcmp.lt.f32.partialorder %v201, 0.0004427343
  %v203 = vsel %vm202, %v200, %v197
  %v204 = vadd.f32 %v194, 1.0
  %v205 = vlog2.pop %v204
  %v206 = vmul.f32 %v205, 0.6931472
  %v207 = vmul.f32 -0.5, %v194
  %v208 = vadd.f32 %v207, 1.0
  %v209 = vmul.f32 %v208, %v194
  %v210 = vand.u32 2147483647, %v194
  %vm211 = vcmp.lt.f32.partialorder %v210, 0.0004427343
  %v212 = vsel %vm211, %v209, %v206
  %vm213 = vcmp.gt.s32.totalorder %v145, %v151
  %vm214 = vcmp.gt.s32.totalorder %v145, %v152
  %vm215 = vmand %vm161, %vm213
  %vm216 = vmand %vm162, %vm214
  %vm217 = vmand %vm215, %vm153
  %vm218 = vmand %vm216, %vm153
  %v219 = vsel %vm217, %v203, 0.0
  %v220 = vsel %vm218, %v212, 0.0
  %221 = vadd.xlane.f32.xlu0 %v219
  %v222 = vpop.xlane.xlu0 %221
  %223 = vadd.xlane.f32.xlu0 %v220
  %v224 = vpop.xlane.xlu0 %223
  %vm225 = vmand %vm161, %vm153
  %vm226 = vmand %vm162, %vm153
  %v227 = vsel %vm225, 1.0, 0.0
  %v228 = vsel %vm226, 1.0, 0.0
  %229 = vadd.xlane.f32.xlu0 %v227
  %v230 = vpop.xlane.xlu0 %229
  %231 = vadd.xlane.f32.xlu0 %v228
  %v232 = vpop.xlane.xlu0 %231
  %v233 = vsub.f32 %v230, 1.0
  %v234 = vsub.f32 %v232, 1.0
  %v235 = vmul.f32 %v230, %v233
  %v236 = vmul.f32 %v232, %v234
  %v237 = vmul.f32 %v235, 0.5
  %v238 = vmul.f32 %v236, 0.5
  %v239 = vmax.f32 %v237, 1.0
  %v240 = vmax.f32 %v238, 1.0
  %vm241 = vcmp.lt.s32.totalorder %v151, 16
  %vm242 = vcmp.lt.s32.totalorder %v152, 16
  %vm243 = vcmp.ge.f32.partialorder %v230, 2.0
  %vm244 = vcmp.ge.f32.partialorder %v232, 2.0
  %vm245 = vmand %vm241, %vm243
  %vm246 = vmand %vm242, %vm244
  %v247 = vrcp.pop %v239
  %v248 = vmul.f32 %v239, %v247
  %v249 = vsub.f32 1.0, %v248
  %v250 = vmul.f32 %v247, %v249
  %v251 = vadd.f32 %v247, %v250
  %vm252 = vweird.f32 %v239
  %vm253 = vweird.f32 %v247
  %vm254 = vmor %vm252, %vm253
  %v255 = vsel %vm254, %v247, %v251
  %v256 = vand.u32 2147483647, %v239
  %vm257 = vcmp.eq.f32.partialorder %v256, 8.507059e+37
  %v258 = vand.u32 %v239, 2147483648
  %v259 = vor.u32 1.1754944e-38, %v258
  %v260 = vsel %vm257, %v259, %v255
  %v261 = vmul.f32 1.0, %v260
  %v262 = vrcp.pop %v240
  %v263 = vmul.f32 %v240, %v262
  %v264 = vsub.f32 1.0, %v263
  %v265 = vmul.f32 %v262, %v264
  %v266 = vadd.f32 %v262, %v265
  %vm267 = vweird.f32 %v240
  %vm268 = vweird.f32 %v262
  %vm269 = vmor %vm267, %vm268
  %v270 = vsel %vm269, %v262, %v266
  %v271 = vand.u32 2147483647, %v240
  %vm272 = vcmp.eq.f32.partialorder %v271, 8.507059e+37
  %v273 = vand.u32 %v240, 2147483648
  %v274 = vor.u32 1.1754944e-38, %v273
  %v275 = vsel %vm272, %v274, %v270
  %v276 = vmul.f32 1.0, %v275
  %v277 = vsel %vm245, %v261, 0.0
  %v278 = vsel %vm246, %v276, 0.0
  %v279 = vmul.f32 %v277, %v222
  %v280 = vmul.f32 %v278, %v224
  %vm281 = vcmask 7168
  %282 = vst.msk [vmem:[%s6] sm:$0xff] %vm281, %v279
  %283 = vst.msk [vmem:[%s6 + $0x8] sm:$0xff] %vm281, %v280
  // Predicated region
  $region26: #{_npair_loss_fn.1} parent=0 // pred_check
    _
  $region27: #{_npair_loss_fn.1} parent=0 // pred_check_branch
    %285 = sbr.rel (0) target = $region29
  $region28: #{_npair_loss_fn.1} parent=0 // pred_region
    _
  $region29: #{_npair_loss_fn.1} parent=0 // pred_fallthru
    _
  // Predicated region
  $region30: #{_npair_loss_fn.1} parent=0 // pred_check
    _
  $region31: #{_npair_loss_fn.1} parent=0 // pred_check_branch
    %287 = sbr.rel (0) target = $region33
  $region32: #{_npair_loss_fn.1} parent=0 // pred_region
    _
  $region33: #{_npair_loss_fn.1} parent=0 // pred_fallthru
    _

</llo_original>
